<compile_context>
chip_gen: v7x
topology: tpu7x:2x2x1
jax: 0.10.0
libtpu: 0.0.40
codegen_flags: <defaults>
</compile_context>

<pallas_src>
import jax
import jax.numpy as jnp
from jax.experimental import pallas as pl
from jax.experimental.pallas import tpu as pltpu


def _round_up(n, m):
    return ((n + m - 1) // m) * m


def batchnet_kernel(x_ref, w1_ref, s1_ref, t1_ref,
                    w2_ref, s2_ref, t2_ref,
                    w3_ref, b3_ref, o_ref):
    """One batch tile of (Linear+BN+ReLU) x2 -> Linear.

    Eval-mode BN (+ the preceding Linear bias) is pre-folded into per-feature
    scale/shift vectors, so each hidden layer is relu((x @ W) * s + t).
    """
    h1 = jnp.dot(x_ref[...], w1_ref[...], preferred_element_type=jnp.float32)
    h1 = jnp.maximum(h1 * s1_ref[...] + t1_ref[...], 0.0)

    h2 = jnp.dot(h1, w2_ref[...], preferred_element_type=jnp.float32)
    h2 = jnp.maximum(h2 * s2_ref[...] + t2_ref[...], 0.0)

    h3 = jnp.dot(h2, w3_ref[...], preferred_element_type=jnp.float32)
    o_ref[...] = (h3 + b3_ref[...]).astype(o_ref.dtype)


def fold_params(params, *, eps=1e-5):
    """One-time prep: fold eval-mode BN + Linear bias into scale/shift.

    BN(x@W + b) == (x@W) * s + t  with  s = g/sqrt(v+eps), t = (b-m)*s + beta.
    Called once at parameter-load time so the per-forward path has no extra
    XLA ops.
    """
    w1, b1 = params["w1"], params["b1"]
    w2, b2 = params["w2"], params["b2"]
    w3, b3 = params["w3"], params["b3"]
    g1, beta1, m1, v1 = params["g1"], params["beta1"], params["m1"], params["v1"]
    g2, beta2, m2, v2 = params["g2"], params["beta2"], params["m2"], params["v2"]

    h1d = w1.shape[1]
    h2d = w2.shape[1]
    out_dim = w3.shape[1]

    s1v = g1 / jnp.sqrt(v1 + eps)
    t1v = (b1 - m1) * s1v + beta1
    s2v = g2 / jnp.sqrt(v2 + eps)
    t2v = (b2 - m2) * s2v + beta2

    return dict(
        w1=w1, s1=s1v.reshape(1, h1d), t1=t1v.reshape(1, h1d),
        w2=w2, s2=s2v.reshape(1, h2d), t2=t2v.reshape(1, h2d),
        w3=w3, b3=b3.reshape(1, out_dim),
    )


def batch_net(x, folded, *, block_batch=512):
    """x: [B, in_dim] f32.  folded: output of fold_params()."""
    w1, s1, t1 = folded["w1"], folded["s1"], folded["t1"]
    w2, s2, t2 = folded["w2"], folded["s2"], folded["t2"]
    w3, b3 = folded["w3"], folded["b3"]

    B, in_dim = x.shape
    out_dim = w3.shape[1]

    # Batch tiling: big tiles amortize per-step overhead; keep >=2 grid steps
    # (when B allows) so both TensorCores get work on v7x.
    tb = min(block_batch, max(_round_up(pl.cdiv(B, 2), 8), 8))
    b_pad = _round_up(B, tb)
    if b_pad != B:
        x = jnp.pad(x, ((0, b_pad - B), (0, 0)))

    def const(a):
        return pl.BlockSpec(a.shape, lambda i: (0, 0))

    out = pl.pallas_call(
        batchnet_kernel,
        out_shape=jax.ShapeDtypeStruct((b_pad, out_dim), jnp.float32),
        grid=(b_pad // tb,),
        in_specs=[
            pl.BlockSpec((tb, in_dim), lambda i: (i, 0)),   # x: tiled over batch
            const(w1), const(s1), const(t1),                # layer 1 (resident)
            const(w2), const(s2), const(t2),                # layer 2 (resident)
            const(w3), const(b3),                           # layer 3 (resident)
        ],
        # Output block spans the full (unpadded) last dim: writeback DMA stays
        # contiguous and HBM write traffic is not inflated by lane padding.
        out_specs=pl.BlockSpec((tb, out_dim), lambda i: (i, 0)),
        compiler_params=pltpu.CompilerParams(
            dimension_semantics=("parallel",),
            # Documents the v7x budget (32 MiB scoped / 64 MiB physical);
            # actual usage here is <1 MiB even at tb=512.
            vmem_limit_bytes=32 * 1024 * 1024),
    )(x, w1, s1, t1, w2, s2, t2, w3, b3)

    return out[:B, :out_dim]


def init_params(key, in_dim, n_hidden_1, n_hidden_2, out_dim):
    """Deterministic init matching PyTorch nn.Linear / nn.BatchNorm1d shapes."""
    keys = jax.random.split(key, 14)

    def linear(kw, kb, fan_in, fan_out):
        bound = 1.0 / jnp.sqrt(fan_in)
        w = jax.random.uniform(kw, (fan_in, fan_out), jnp.float32, -bound, bound)
        b = jax.random.uniform(kb, (fan_out,), jnp.float32, -bound, bound)
        return w, b

    def bn(kg, kb, km, kv, n):
        g = jax.random.uniform(kg, (n,), jnp.float32, 0.5, 1.5)
        beta = jax.random.uniform(kb, (n,), jnp.float32, -0.5, 0.5)
        mean = jax.random.uniform(km, (n,), jnp.float32, -0.5, 0.5)
        var = jax.random.uniform(kv, (n,), jnp.float32, 0.5, 1.5)
        return g, beta, mean, var

    w1, b1 = linear(keys[0], keys[1], in_dim, n_hidden_1)
    w2, b2 = linear(keys[2], keys[3], n_hidden_1, n_hidden_2)
    w3, b3 = linear(keys[4], keys[5], n_hidden_2, out_dim)
    g1, beta1, m1, v1 = bn(keys[6], keys[7], keys[8], keys[9], n_hidden_1)
    g2, beta2, m2, v2 = bn(keys[10], keys[11], keys[12], keys[13], n_hidden_2)
    return dict(w1=w1, b1=b1, w2=w2, b2=b2, w3=w3, b3=b3,
                g1=g1, beta1=beta1, m1=m1, v1=v1,
                g2=g2, beta2=beta2, m2=m2, v2=v2)


def ref_forward(x, p, eps=1e-5):
    """Pure-JAX reference: Linear -> BN(eval) -> ReLU, x2, then Linear."""
    h = x @ p["w1"] + p["b1"]
    h = (h - p["m1"]) / jnp.sqrt(p["v1"] + eps) * p["g1"] + p["beta1"]
    h = jnp.maximum(h, 0.0)
    h = h @ p["w2"] + p["b2"]
    h = (h - p["m2"]) / jnp.sqrt(p["v2"] + eps) * p["g2"] + p["beta2"]
    h = jnp.maximum(h, 0.0)
    return h @ p["w3"] + p["b3"]


if __name__ == "__main__":
    key = jax.random.PRNGKey(0)
    k_x, k_p = jax.random.split(key)

    # Small but multi-tile: B=200 -> tb=104 -> 2 grid steps (with padding).
    batch, in_dim, n_hidden_1, n_hidden_2, out_dim = 200, 32, 64, 64, 16
    x = jax.random.normal(k_x, (batch, in_dim), jnp.float32)
    params = init_params(k_p, in_dim, n_hidden_1, n_hidden_2, out_dim)

    # One-time prep (BN fold) hoisted out of the per-forward path.
    folded = jax.tree_util.tree_map(jax.block_until_ready, fold_params(params))

    out = jax.block_until_ready(batch_net(x, folded))

    ref = ref_forward(x, params)
    assert out.shape == (batch, out_dim)
    err = float(jnp.max(jnp.abs(out - ref)))
    assert jnp.allclose(out, ref, atol=1e-4, rtol=1e-4), f"max abs err {err}"

    print("KERNEL_OK")
</pallas_src>

<mosaic_0001>
module attributes {stable_mosaic.version = 11 : i64} {
  func.func @batchnet_kernel(%arg0: i32, %arg1: memref<104x32xf32, #tpu.memory_space<vmem>>, %arg2: memref<32x64xf32, #tpu.memory_space<vmem>>, %arg3: memref<1x64xf32, #tpu.memory_space<vmem>>, %arg4: memref<1x64xf32, #tpu.memory_space<vmem>>, %arg5: memref<64x64xf32, #tpu.memory_space<vmem>>, %arg6: memref<1x64xf32, #tpu.memory_space<vmem>>, %arg7: memref<1x64xf32, #tpu.memory_space<vmem>>, %arg8: memref<64x16xf32, #tpu.memory_space<vmem>>, %arg9: memref<1x16xf32, #tpu.memory_space<vmem>>, %arg10: memref<104x16xf32, #tpu.memory_space<vmem>>) attributes {dimension_semantics = [#tpu.dimension_semantics<parallel>], iteration_bounds = array<i64: 2>, scalar_prefetch = 0 : i64, scratch_operands = 0 : i64, tpu.core_type = #tpu.core_type<tc>, window_params = [{transform_indices = @transform_0, window_bounds = array<i64: 104, 32>}, {pipeline_mode = #tpu.pipeline_mode<synchronous>, transform_indices = @transform_1, window_bounds = array<i64: 32, 64>}, {pipeline_mode = #tpu.pipeline_mode<synchronous>, transform_indices = @transform_2, window_bounds = array<i64: 1, 64>}, {pipeline_mode = #tpu.pipeline_mode<synchronous>, transform_indices = @transform_3, window_bounds = array<i64: 1, 64>}, {pipeline_mode = #tpu.pipeline_mode<synchronous>, transform_indices = @transform_4, window_bounds = array<i64: 64, 64>}, {pipeline_mode = #tpu.pipeline_mode<synchronous>, transform_indices = @transform_5, window_bounds = array<i64: 1, 64>}, {pipeline_mode = #tpu.pipeline_mode<synchronous>, transform_indices = @transform_6, window_bounds = array<i64: 1, 64>}, {pipeline_mode = #tpu.pipeline_mode<synchronous>, transform_indices = @transform_7, window_bounds = array<i64: 64, 16>}, {pipeline_mode = #tpu.pipeline_mode<synchronous>, transform_indices = @transform_8, window_bounds = array<i64: 1, 16>}, {transform_indices = @transform_9, window_bounds = array<i64: 104, 16>}]} {
    %c0 = arith.constant 0 : index
    %c0_0 = arith.constant 0 : index
    %0 = vector.load %arg1[%c0, %c0_0] : memref<104x32xf32, #tpu.memory_space<vmem>>, vector<104x32xf32>
    %c0_1 = arith.constant 0 : index
    %c0_2 = arith.constant 0 : index
    %1 = vector.load %arg2[%c0_1, %c0_2] : memref<32x64xf32, #tpu.memory_space<vmem>>, vector<32x64xf32>
    %cst = arith.constant dense<0.000000e+00> : vector<104x64xf32>
    %2 = tpu.matmul %0, %1, %cst {dimension_numbers = #tpu.dot_dimension_numbers<[1], [0], [0], [1], [0, 0, 1, 1], [], []>} : vector<104x32xf32>, vector<32x64xf32>, vector<104x64xf32> -> vector<104x64xf32>
    %c0_3 = arith.constant 0 : index
    %c0_4 = arith.constant 0 : index
    %3 = vector.load %arg3[%c0_3, %c0_4] : memref<1x64xf32, #tpu.memory_space<vmem>>, vector<1x64xf32>
    %4 = vector.broadcast %3 : vector<1x64xf32> to vector<104x64xf32>
    %5 = arith.mulf %2, %4 : vector<104x64xf32>
    %c0_5 = arith.constant 0 : index
    %c0_6 = arith.constant 0 : index
    %6 = vector.load %arg4[%c0_5, %c0_6] : memref<1x64xf32, #tpu.memory_space<vmem>>, vector<1x64xf32>
    %7 = vector.broadcast %6 : vector<1x64xf32> to vector<104x64xf32>
    %8 = arith.addf %5, %7 : vector<104x64xf32>
    %cst_7 = arith.constant 0.000000e+00 : f32
    %9 = vector.broadcast %cst_7 : f32 to vector<104x64xf32>
    %10 = arith.maximumf %8, %9 : vector<104x64xf32>
    %c0_8 = arith.constant 0 : index
    %c0_9 = arith.constant 0 : index
    %11 = vector.load %arg5[%c0_8, %c0_9] : memref<64x64xf32, #tpu.memory_space<vmem>>, vector<64x64xf32>
    %cst_10 = arith.constant dense<0.000000e+00> : vector<104x64xf32>
    %12 = tpu.matmul %10, %11, %cst_10 {dimension_numbers = #tpu.dot_dimension_numbers<[1], [0], [0], [1], [0, 0, 1, 1], [], []>} : vector<104x64xf32>, vector<64x64xf32>, vector<104x64xf32> -> vector<104x64xf32>
    %c0_11 = arith.constant 0 : index
    %c0_12 = arith.constant 0 : index
    %13 = vector.load %arg6[%c0_11, %c0_12] : memref<1x64xf32, #tpu.memory_space<vmem>>, vector<1x64xf32>
    %14 = vector.broadcast %13 : vector<1x64xf32> to vector<104x64xf32>
    %15 = arith.mulf %12, %14 : vector<104x64xf32>
    %c0_13 = arith.constant 0 : index
    %c0_14 = arith.constant 0 : index
    %16 = vector.load %arg7[%c0_13, %c0_14] : memref<1x64xf32, #tpu.memory_space<vmem>>, vector<1x64xf32>
    %17 = vector.broadcast %16 : vector<1x64xf32> to vector<104x64xf32>
    %18 = arith.addf %15, %17 : vector<104x64xf32>
    %cst_15 = arith.constant 0.000000e+00 : f32
    %19 = vector.broadcast %cst_15 : f32 to vector<104x64xf32>
    %20 = arith.maximumf %18, %19 : vector<104x64xf32>
    %c0_16 = arith.constant 0 : index
    %c0_17 = arith.constant 0 : index
    %21 = vector.load %arg8[%c0_16, %c0_17] : memref<64x16xf32, #tpu.memory_space<vmem>>, vector<64x16xf32>
    %cst_18 = arith.constant dense<0.000000e+00> : vector<104x16xf32>
    %22 = tpu.matmul %20, %21, %cst_18 {dimension_numbers = #tpu.dot_dimension_numbers<[1], [0], [0], [1], [0, 0, 1, 1], [], []>} : vector<104x64xf32>, vector<64x16xf32>, vector<104x16xf32> -> vector<104x16xf32>
    %c0_19 = arith.constant 0 : index
    %c0_20 = arith.constant 0 : index
    %23 = vector.load %arg9[%c0_19, %c0_20] : memref<1x16xf32, #tpu.memory_space<vmem>>, vector<1x16xf32>
    %24 = vector.broadcast %23 : vector<1x16xf32> to vector<104x16xf32>
    %25 = arith.addf %22, %24 : vector<104x16xf32>
    %c0_21 = arith.constant 0 : index
    %c0_22 = arith.constant 0 : index
    %26 = vector.load %arg10[%c0_21, %c0_22] : memref<104x16xf32, #tpu.memory_space<vmem>>, vector<104x16xf32>
    tpu.vector_store %arg10[%c0_21, %c0_22], %25 {strides = array<i32>} : memref<104x16xf32, #tpu.memory_space<vmem>>, vector<104x16xf32>,
    return
  }
  func.func @transform_0(%arg0: i32) -> (i32, i32) {
    %c0_i32 = arith.constant 0 : i32
    %c0_i32_0 = arith.constant 0 : i32
    return %arg0, %c0_i32 : i32, i32
  }
  func.func @transform_1(%arg0: i32) -> (i32, i32) {
    %c0_i32 = arith.constant 0 : i32
    %c0_i32_0 = arith.constant 0 : i32
    %c0_i32_1 = arith.constant 0 : i32
    return %c0_i32, %c0_i32_0 : i32, i32
  }
  func.func @transform_2(%arg0: i32) -> (i32, i32) {
    %c0_i32 = arith.constant 0 : i32
    %c0_i32_0 = arith.constant 0 : i32
    %c0_i32_1 = arith.constant 0 : i32
    return %c0_i32, %c0_i32_0 : i32, i32
  }
  func.func @transform_3(%arg0: i32) -> (i32, i32) {
    %c0_i32 = arith.constant 0 : i32
    %c0_i32_0 = arith.constant 0 : i32
    %c0_i32_1 = arith.constant 0 : i32
    return %c0_i32, %c0_i32_0 : i32, i32
  }
  func.func @transform_4(%arg0: i32) -> (i32, i32) {
    %c0_i32 = arith.constant 0 : i32
    %c0_i32_0 = arith.constant 0 : i32
    %c0_i32_1 = arith.constant 0 : i32
    return %c0_i32, %c0_i32_0 : i32, i32
  }
  func.func @transform_5(%arg0: i32) -> (i32, i32) {
    %c0_i32 = arith.constant 0 : i32
    %c0_i32_0 = arith.constant 0 : i32
    %c0_i32_1 = arith.constant 0 : i32
    return %c0_i32, %c0_i32_0 : i32, i32
  }
  func.func @transform_6(%arg0: i32) -> (i32, i32) {
    %c0_i32 = arith.constant 0 : i32
    %c0_i32_0 = arith.constant 0 : i32
    %c0_i32_1 = arith.constant 0 : i32
    return %c0_i32, %c0_i32_0 : i32, i32
  }
  func.func @transform_7(%arg0: i32) -> (i32, i32) {
    %c0_i32 = arith.constant 0 : i32
    %c0_i32_0 = arith.constant 0 : i32
    %c0_i32_1 = arith.constant 0 : i32
    return %c0_i32, %c0_i32_0 : i32, i32
  }
  func.func @transform_8(%arg0: i32) -> (i32, i32) {
    %c0_i32 = arith.constant 0 : i32
    %c0_i32_0 = arith.constant 0 : i32
    %c0_i32_1 = arith.constant 0 : i32
    return %c0_i32, %c0_i32_0 : i32, i32
  }
  func.func @transform_9(%arg0: i32) -> (i32, i32) {
    %c0_i32 = arith.constant 0 : i32
    %c0_i32_0 = arith.constant 0 : i32
    return %arg0, %c0_i32 : i32, i32
  }
}

</mosaic_0001>

<llo_original>
// kernel: tpu_custom_call.1
$region0: #{tpu_custom_call.1}
  #allocation0 [shape = 'u32[]', space=smem, size = 0x4, offset = 0x4, fixed_abs, tag = 'smem constant byte address 0x4 - core index']
  #allocation1 [shape = 'u32[144,128]{1,0:T(1,128)}', space=vmem, size = 0x12000, scoped, tag = 'internal scratch']
  %s0 = inlined_call_operand.vmem [shape: f32[208,32], index: 0, kind: input, shape index: {}]
  %s1 = inlined_call_operand.vmem [shape: f32[32,64], index: 1, kind: input, shape index: {}]
  %s2 = inlined_call_operand.vmem [shape: f32[1,64], index: 2, kind: input, shape index: {}]
  %s3 = inlined_call_operand.vmem [shape: f32[1,64], index: 3, kind: input, shape index: {}]
  %s4 = inlined_call_operand.vmem [shape: f32[64,64], index: 4, kind: input, shape index: {}]
  %s5 = inlined_call_operand.vmem [shape: f32[1,64], index: 5, kind: input, shape index: {}]
  %s6 = inlined_call_operand.vmem [shape: f32[1,64], index: 6, kind: input, shape index: {}]
  %s7 = inlined_call_operand.vmem [shape: f32[64,16], index: 7, kind: input, shape index: {}]
  %s8 = inlined_call_operand.vmem [shape: f32[1,16], index: 8, kind: input, shape index: {}]
  %s9 = inlined_call_operand.vmem [shape: f32[208,16], index: 9, kind: output, shape index: {}]
  %s10 = sld [smem:[#allocation0]]
  $region69: #{tpu_custom_call.1} parent=0
    _
  %s12 = ssub.s32 1, %s10
  %s13 = scalar_select 0, %s12, %s10
  loop: start=0, step=1, limit=4
  $region2: #{tpu_custom_call.1} parent=0 // loop_pre_header
    _
  $region3: #{tpu_custom_call.1} parent=0 // loop_header
    %s15 = sphi 0, %s19
    %p16 = scmp.ge.s32.totalorder %s15, 4
    %s25 = sphi 0, %s27
    %s28 = sphi 0, %s25
    %s29 = sphi 0, %s28
    %s45 = sphi 0, %s29
    %s49 = sphi 0, %s49
    %s51 = sphi 0, %s49
    %s52 = sphi 0, %s51
    %s66 = sphi 0, %s52
    %s70 = sphi 0, %s70
    %s72 = sphi 0, %s70
    %s73 = sphi 0, %s72
    %s87 = sphi 0, %s73
    %s91 = sphi 0, %s91
    %s93 = sphi 0, %s91
    %s94 = sphi 0, %s93
    %s108 = sphi 0, %s94
    %s112 = sphi 0, %s112
    %s114 = sphi 0, %s112
    %s115 = sphi 0, %s114
    %s129 = sphi 0, %s115
    %s133 = sphi 0, %s133
    %s135 = sphi 0, %s133
    %s136 = sphi 0, %s135
    %s150 = sphi 0, %s136
    %s154 = sphi 0, %s154
    %s156 = sphi 0, %s154
    %s157 = sphi 0, %s156
    %s171 = sphi 0, %s157
    %s175 = sphi 0, %s175
    %s177 = sphi 0, %s175
    %s178 = sphi 0, %s177
    %s192 = sphi 0, %s178
    %s196 = sphi 0, %s196
    %s198 = sphi 0, %s196
    %s199 = sphi 0, %s198
    %s213 = sphi 0, %s199
    %s219 = sphi 0, %s221
    %s222 = sphi 0, %s219
    %s223 = sphi 0, %s222
    %s239 = sphi 0, %s223
  $region4: #{tpu_custom_call.1} parent=0 // loop_header_branch
    %18 = sbr.rel (%p16) target = $region8
  $region5: #{tpu_custom_call.1} parent=0 // loop_body
    %s20 = ssub.s32 %s15, 1
    %s21 = ssub.s32 %s15, 2
    %s22 = sadd.s32 %s15, 1
    %s23 = ssub.s32 %s15, %s22
    %p24 = scmp.eq.s32.totalorder %s23, 0
    %s26 = sadd.s32 %s25, 1
    %s27 = scalar_select %p24, %s25, %s26
    %p30 = pneg %p24
    %p31 = scmp.eq.s32.totalorder %s15, 1
    %p32 = por %p30, %p31
    %p33 = scmp.ne.s32.totalorder %s25, %s28
    %p34 = scmp.eq.s32.totalorder %s15, 0
    %p35 = por %p33, %p34
    %p36 = scmp.ne.s32.totalorder %s25, %s28
    %p37 = scmp.eq.s32.totalorder %s20, 1
    %p38 = por %p36, %p37
    %p39 = scmp.ne.s32.totalorder %s28, %s29
    %p40 = scmp.eq.s32.totalorder %s20, 0
    %p41 = por %p39, %p40
    %p42 = scmp.ne.s32.totalorder %s28, %s29
    %p43 = scmp.eq.s32.totalorder %s21, 1
    %p44 = por %p42, %p43
    %p46 = scmp.ne.s32.totalorder %s29, %s45
    %p47 = scmp.eq.s32.totalorder %s21, 0
    %p48 = por %p46, %p47
    %s50 = sadd.s32 %s49, 1
    %p53 = scmp.eq.s32.totalorder %s15, 1
    %p54 = scmp.ne.s32.totalorder %s49, %s51
    %p55 = scmp.eq.s32.totalorder %s15, 0
    %p56 = por %p54, %p55
    %p57 = scmp.ne.s32.totalorder %s49, %s51
    %p58 = scmp.eq.s32.totalorder %s20, 1
    %p59 = por %p57, %p58
    %p60 = scmp.ne.s32.totalorder %s51, %s52
    %p61 = scmp.eq.s32.totalorder %s20, 0
    %p62 = por %p60, %p61
    %p63 = scmp.ne.s32.totalorder %s51, %s52
    %p64 = scmp.eq.s32.totalorder %s21, 1
    %p65 = por %p63, %p64
    %p67 = scmp.ne.s32.totalorder %s52, %s66
    %p68 = scmp.eq.s32.totalorder %s21, 0
    %p69 = por %p67, %p68
    %s71 = sadd.s32 %s70, 1
    %p74 = scmp.eq.s32.totalorder %s15, 1
    %p75 = scmp.ne.s32.totalorder %s70, %s72
    %p76 = scmp.eq.s32.totalorder %s15, 0
    %p77 = por %p75, %p76
    %p78 = scmp.ne.s32.totalorder %s70, %s72
    %p79 = scmp.eq.s32.totalorder %s20, 1
    %p80 = por %p78, %p79
    %p81 = scmp.ne.s32.totalorder %s72, %s73
    %p82 = scmp.eq.s32.totalorder %s20, 0
    %p83 = por %p81, %p82
    %p84 = scmp.ne.s32.totalorder %s72, %s73
    %p85 = scmp.eq.s32.totalorder %s21, 1
    %p86 = por %p84, %p85
    %p88 = scmp.ne.s32.totalorder %s73, %s87
    %p89 = scmp.eq.s32.totalorder %s21, 0
    %p90 = por %p88, %p89
    %s92 = sadd.s32 %s91, 1
    %p95 = scmp.eq.s32.totalorder %s15, 1
    %p96 = scmp.ne.s32.totalorder %s91, %s93
    %p97 = scmp.eq.s32.totalorder %s15, 0
    %p98 = por %p96, %p97
    %p99 = scmp.ne.s32.totalorder %s91, %s93
    %p100 = scmp.eq.s32.totalorder %s20, 1
    %p101 = por %p99, %p100
    %p102 = scmp.ne.s32.totalorder %s93, %s94
    %p103 = scmp.eq.s32.totalorder %s20, 0
    %p104 = por %p102, %p103
    %p105 = scmp.ne.s32.totalorder %s93, %s94
    %p106 = scmp.eq.s32.totalorder %s21, 1
    %p107 = por %p105, %p106
    %p109 = scmp.ne.s32.totalorder %s94, %s108
    %p110 = scmp.eq.s32.totalorder %s21, 0
    %p111 = por %p109, %p110
    %s113 = sadd.s32 %s112, 1
    %p116 = scmp.eq.s32.totalorder %s15, 1
    %p117 = scmp.ne.s32.totalorder %s112, %s114
    %p118 = scmp.eq.s32.totalorder %s15, 0
    %p119 = por %p117, %p118
    %p120 = scmp.ne.s32.totalorder %s112, %s114
    %p121 = scmp.eq.s32.totalorder %s20, 1
    %p122 = por %p120, %p121
    %p123 = scmp.ne.s32.totalorder %s114, %s115
    %p124 = scmp.eq.s32.totalorder %s20, 0
    %p125 = por %p123, %p124
    %p126 = scmp.ne.s32.totalorder %s114, %s115
    %p127 = scmp.eq.s32.totalorder %s21, 1
    %p128 = por %p126, %p127
    %p130 = scmp.ne.s32.totalorder %s115, %s129
    %p131 = scmp.eq.s32.totalorder %s21, 0
    %p132 = por %p130, %p131
    %s134 = sadd.s32 %s133, 1
    %p137 = scmp.eq.s32.totalorder %s15, 1
    %p138 = scmp.ne.s32.totalorder %s133, %s135
    %p139 = scmp.eq.s32.totalorder %s15, 0
    %p140 = por %p138, %p139
    %p141 = scmp.ne.s32.totalorder %s133, %s135
    %p142 = scmp.eq.s32.totalorder %s20, 1
    %p143 = por %p141, %p142
    %p144 = scmp.ne.s32.totalorder %s135, %s136
    %p145 = scmp.eq.s32.totalorder %s20, 0
    %p146 = por %p144, %p145
    %p147 = scmp.ne.s32.totalorder %s135, %s136
    %p148 = scmp.eq.s32.totalorder %s21, 1
    %p149 = por %p147, %p148
    %p151 = scmp.ne.s32.totalorder %s136, %s150
    %p152 = scmp.eq.s32.totalorder %s21, 0
    %p153 = por %p151, %p152
    %s155 = sadd.s32 %s154, 1
    %p158 = scmp.eq.s32.totalorder %s15, 1
    %p159 = scmp.ne.s32.totalorder %s154, %s156
    %p160 = scmp.eq.s32.totalorder %s15, 0
    %p161 = por %p159, %p160
    %p162 = scmp.ne.s32.totalorder %s154, %s156
    %p163 = scmp.eq.s32.totalorder %s20, 1
    %p164 = por %p162, %p163
    %p165 = scmp.ne.s32.totalorder %s156, %s157
    %p166 = scmp.eq.s32.totalorder %s20, 0
    %p167 = por %p165, %p166
    %p168 = scmp.ne.s32.totalorder %s156, %s157
    %p169 = scmp.eq.s32.totalorder %s21, 1
    %p170 = por %p168, %p169
    %p172 = scmp.ne.s32.totalorder %s157, %s171
    %p173 = scmp.eq.s32.totalorder %s21, 0
    %p174 = por %p172, %p173
    %s176 = sadd.s32 %s175, 1
    %p179 = scmp.eq.s32.totalorder %s15, 1
    %p180 = scmp.ne.s32.totalorder %s175, %s177
    %p181 = scmp.eq.s32.totalorder %s15, 0
    %p182 = por %p180, %p181
    %p183 = scmp.ne.s32.totalorder %s175, %s177
    %p184 = scmp.eq.s32.totalorder %s20, 1
    %p185 = por %p183, %p184
    %p186 = scmp.ne.s32.totalorder %s177, %s178
    %p187 = scmp.eq.s32.totalorder %s20, 0
    %p188 = por %p186, %p187
    %p189 = scmp.ne.s32.totalorder %s177, %s178
    %p190 = scmp.eq.s32.totalorder %s21, 1
    %p191 = por %p189, %p190
    %p193 = scmp.ne.s32.totalorder %s178, %s192
    %p194 = scmp.eq.s32.totalorder %s21, 0
    %p195 = por %p193, %p194
    %s197 = sadd.s32 %s196, 1
    %p200 = scmp.eq.s32.totalorder %s15, 1
    %p201 = scmp.ne.s32.totalorder %s196, %s198
    %p202 = scmp.eq.s32.totalorder %s15, 0
    %p203 = por %p201, %p202
    %p204 = scmp.ne.s32.totalorder %s196, %s198
    %p205 = scmp.eq.s32.totalorder %s20, 1
    %p206 = por %p204, %p205
    %p207 = scmp.ne.s32.totalorder %s198, %s199
    %p208 = scmp.eq.s32.totalorder %s20, 0
    %p209 = por %p207, %p208
    %p210 = scmp.ne.s32.totalorder %s198, %s199
    %p211 = scmp.eq.s32.totalorder %s21, 1
    %p212 = por %p210, %p211
    %p214 = scmp.ne.s32.totalorder %s199, %s213
    %p215 = scmp.eq.s32.totalorder %s21, 0
    %p216 = por %p214, %p215
    %s217 = ssub.s32 %s15, %s22
    %p218 = scmp.eq.s32.totalorder %s217, 0
    %s220 = sadd.s32 %s219, 1
    %s221 = scalar_select %p218, %s219, %s220
    %p224 = pneg %p218
    %p225 = scmp.eq.s32.totalorder %s15, 1
    %p226 = por %p224, %p225
    %p227 = scmp.ne.s32.totalorder %s219, %s222
    %p228 = scmp.eq.s32.totalorder %s15, 0
    %p229 = por %p227, %p228
    %p230 = scmp.ne.s32.totalorder %s219, %s222
    %p231 = scmp.eq.s32.totalorder %s20, 1
    %p232 = por %p230, %p231
    %p233 = scmp.ne.s32.totalorder %s222, %s223
    %p234 = scmp.eq.s32.totalorder %s20, 0
    %p235 = por %p233, %p234
    %p236 = scmp.ne.s32.totalorder %s222, %s223
    %p237 = scmp.eq.s32.totalorder %s21, 1
    %p238 = por %p236, %p237
    %p240 = scmp.ne.s32.totalorder %s223, %s239
    %p241 = scmp.eq.s32.totalorder %s21, 0
    %p242 = por %p240, %p241
    %p243 = scmp.le.s32.totalorder 1, %s15
    %p244 = scmp.lt.s32.totalorder %s15, 3
    %p245 = pnand %p243, %p244
    %p246 = pneg %p245
    // Predicated region
    $region9: #{tpu_custom_call.1} parent=5 // pred_check
      _
    $region10: #{tpu_custom_call.1} parent=5 // pred_check_branch
      %248 = sbr.rel (%p245) target = $region12
    $region11: #{tpu_custom_call.1} parent=5 // pred_region
      %s249 = ssub.s32 %s15, 1
      // Predicated region
      $region13: #{tpu_custom_call.1} parent=11 // pred_check
        %p250 = pneg %p62
      $region14: #{tpu_custom_call.1} parent=11 // pred_check_branch
        %252 = sbr.rel (%p250) target = $region16
      $region15: #{tpu_custom_call.1} parent=11 // pred_region
        _
      $region16: #{tpu_custom_call.1} parent=11 // pred_fallthru
        _
      // Predicated region
      $region17: #{tpu_custom_call.1} parent=11 // pred_check
        %p253 = pneg %p83
      $region18: #{tpu_custom_call.1} parent=11 // pred_check_branch
        %255 = sbr.rel (%p253) target = $region20
      $region19: #{tpu_custom_call.1} parent=11 // pred_region
        _
      $region20: #{tpu_custom_call.1} parent=11 // pred_fallthru
        _
      // Predicated region
      $region21: #{tpu_custom_call.1} parent=11 // pred_check
        %p256 = pneg %p104
      $region22: #{tpu_custom_call.1} parent=11 // pred_check_branch
        %258 = sbr.rel (%p256) target = $region24
      $region23: #{tpu_custom_call.1} parent=11 // pred_region
        _
      $region24: #{tpu_custom_call.1} parent=11 // pred_fallthru
        _
      // Predicated region
      $region25: #{tpu_custom_call.1} parent=11 // pred_check
        %p259 = pneg %p125
      $region26: #{tpu_custom_call.1} parent=11 // pred_check_branch
        %261 = sbr.rel (%p259) target = $region28
      $region27: #{tpu_custom_call.1} parent=11 // pred_region
        _
      $region28: #{tpu_custom_call.1} parent=11 // pred_fallthru
        _
      // Predicated region
      $region29: #{tpu_custom_call.1} parent=11 // pred_check
        %p262 = pneg %p146
      $region30: #{tpu_custom_call.1} parent=11 // pred_check_branch
        %264 = sbr.rel (%p262) target = $region32
      $region31: #{tpu_custom_call.1} parent=11 // pred_region
        _
      $region32: #{tpu_custom_call.1} parent=11 // pred_fallthru
        _
      // Predicated region
      $region33: #{tpu_custom_call.1} parent=11 // pred_check
        %p265 = pneg %p167
      $region34: #{tpu_custom_call.1} parent=11 // pred_check_branch
        %267 = sbr.rel (%p265) target = $region36
      $region35: #{tpu_custom_call.1} parent=11 // pred_region
        _
      $region36: #{tpu_custom_call.1} parent=11 // pred_fallthru
        _
      // Predicated region
      $region37: #{tpu_custom_call.1} parent=11 // pred_check
        %p268 = pneg %p188
      $region38: #{tpu_custom_call.1} parent=11 // pred_check_branch
        %270 = sbr.rel (%p268) target = $region40
      $region39: #{tpu_custom_call.1} parent=11 // pred_region
        _
      $region40: #{tpu_custom_call.1} parent=11 // pred_fallthru
        _
      // Predicated region
      $region41: #{tpu_custom_call.1} parent=11 // pred_check
        %p271 = pneg %p209
      $region42: #{tpu_custom_call.1} parent=11 // pred_check_branch
        %273 = sbr.rel (%p271) target = $region44
      $region43: #{tpu_custom_call.1} parent=11 // pred_region
        _
      $region44: #{tpu_custom_call.1} parent=11 // pred_fallthru
        _
    $region12: #{tpu_custom_call.1} parent=5 // pred_fallthru
      _
    %p274 = scmp.lt.s32.totalorder %s15, 2
    // Predicated region
    $region45: #{tpu_custom_call.1} parent=5 // pred_check
      %p275 = pneg %p274
    $region46: #{tpu_custom_call.1} parent=5 // pred_check_branch
      %277 = sbr.rel (%p275) target = $region48
    $region47: #{tpu_custom_call.1} parent=5 // pred_region
      // Predicated region
      $region49: #{tpu_custom_call.1} parent=47 // pred_check
        %p278 = pneg %p35
      $region50: #{tpu_custom_call.1} parent=47 // pred_check_branch
        %280 = sbr.rel (%p278) target = $region52
      $region51: #{tpu_custom_call.1} parent=47 // pred_region
        %s281 = smul.u32 13, %s15
        %p282 = scmp.lt.s32.totalorder %s281, 25
        %s283 = scalar_select %p282, %s281, 25
        %s284 = smul.addr %s283, 8
        %s285 = scalar_lea.vmem %s0, %s284
        %s286 = smul.u32 13, %s15
      $region52: #{tpu_custom_call.1} parent=47 // pred_fallthru
        _
    $region48: #{tpu_custom_call.1} parent=5 // pred_fallthru
      _
    %p287 = scmp.le.s32.totalorder 1, %s15
    %p288 = scmp.lt.s32.totalorder %s15, 3
    %p289 = pnand %p287, %p288
    %p290 = pneg %p289
    // Predicated region
    $region53: #{tpu_custom_call.1} parent=5 // pred_check
      _
    $region54: #{tpu_custom_call.1} parent=5 // pred_check_branch
      %292 = sbr.rel (%p289) target = $region56
    $region55: #{tpu_custom_call.1} parent=5 // pred_region
      %s293 = ssub.s32 %s15, 1
      %s294 = smul.u32 13, %s20
      %p295 = scmp.lt.s32.totalorder %s294, 25
      %s296 = scalar_select %p295, %s294, 25
      %s297 = smul.addr %s296, 8
      %s298 = scalar_lea.vmem %s0, %s297
      %p299 = pneg %p41
      %p300 = pneg %p38
      %p301 = pneg %p62
      %p302 = pneg %p59
      %p303 = pneg %p83
      %p304 = pneg %p80
      %p305 = pneg %p104
      %p306 = pneg %p101
      %p307 = pneg %p125
      %p308 = pneg %p122
      %p309 = pneg %p146
      %p310 = pneg %p143
      %p311 = pneg %p167
      %p312 = pneg %p164
      %p313 = pneg %p188
      %p314 = pneg %p185
      %p315 = pneg %p209
      %p316 = pneg %p206
      %p317 = pneg %p235
      %p318 = pneg %p232
      %s319 = smul.u32 13, %s20
      %p320 = scmp.lt.s32.totalorder %s319, 25
      %s321 = scalar_select %p320, %s319, 25
      %s322 = smul.addr %s321, 8
      %s323 = scalar_lea.vmem %s9, %s322
      %s324 = smul.u32 13, %s20
      %p325 = scmp.lt.s32.totalorder %s324, 25
      %s326 = scalar_select %p325, %s324, 25
      %s327 = smul.addr %s326, 8
      %s328 = scalar_lea.vmem %s0, %s327
      %s329 = smul.u32 13, %s20
      %s330 = smul.u32 13, %s20
      %p331 = scmp.lt.s32.totalorder %s330, 25
      %s332 = scalar_select %p331, %s330, 25
      %s333 = smul.addr %s332, 8
      %s334 = scalar_lea.vmem %s9, %s333
      %s335 = smul.u32 13, %s20
      %v336 = vld [vmem:[%s328] sm:$0xff]
      %v337 = vld [vmem:[%s328 + $0x8] sm:$0xff]
      %v338 = vld [vmem:[%s328 + $0x10] sm:$0xff]
      %v339 = vld [vmem:[%s328 + $0x18] sm:$0xff]
      %v340 = vld [vmem:[%s328 + $0x20] sm:$0xff]
      %v341 = vld [vmem:[%s328 + $0x28] sm:$0xff]
      %v342 = vld [vmem:[%s328 + $0x30] sm:$0xff]
      %v343 = vld [vmem:[%s328 + $0x38] sm:$0xff]
      %v344 = vld [vmem:[%s328 + $0x40] sm:$0xff]
      %v345 = vld [vmem:[%s328 + $0x48] sm:$0xff]
      %v346 = vld [vmem:[%s328 + $0x50] sm:$0xff]
      %v347 = vld [vmem:[%s328 + $0x58] sm:$0xff]
      %v348 = vld [vmem:[%s328 + $0x60] sm:$0xff]
      %v349 = vld [vmem:[%s1] sm:$0xff]
      %v350 = vld [vmem:[%s1 + $0x8] sm:$0xff]
      %v351 = vld [vmem:[%s1 + $0x10] sm:$0xff]
      %v352 = vld [vmem:[%s1 + $0x18] sm:$0xff]
      %vm353 = vcmask 261120
      %v355 = vsel %vm353, %v336, 0
      %v358 = vsel %vm353, %v337, 0
      %v361 = vsel %vm353, %v338, 0
      %v364 = vsel %vm353, %v339, 0
      %v367 = vsel %vm353, %v340, 0
      %v370 = vsel %vm353, %v341, 0
      %v373 = vsel %vm353, %v342, 0
      %v376 = vsel %vm353, %v343, 0
      %v379 = vsel %vm353, %v344, 0
      %v382 = vsel %vm353, %v345, 0
      %v385 = vsel %vm353, %v346, 0
      %v388 = vsel %vm353, %v347, 0
      %v391 = vsel %vm353, %v348, 0
      %393 = vmatprep.subr.mxu0 0.0
      %394 = vmatpush1.msra.mxu0 %v349
      %395 = vmatprep.subr.mxu0 0.0
      %396 = vmatpush1.msra.mxu0 %v350
      %397 = vmatprep.subr.mxu0 0.0
      %398 = vmatpush1.msra.mxu0 %v351
      %399 = vmatprep.subr.mxu0 0.0
      %400 = vmatpush1.msra.mxu0 %v352
      %401 = vmatprep.subr.mxu0 0.0
      %402 = vmatpush1.msra.mxu0 0.0
      %403 = vmatprep.subr.mxu0 0.0
      %404 = vmatpush1.msra.mxu0 0.0
      %405 = vmatprep.subr.mxu0 0.0
      %406 = vmatpush1.msra.mxu0 0.0
      %407 = vmatprep.subr.mxu0 0.0
      %408 = vmatpush1.msra.mxu0 0.0
      %409 = vmatprep.subr.mxu0 0.0
      %410 = vmatpush1.msra.mxu0 0.0
      %411 = vmatprep.subr.mxu0 0.0
      %412 = vmatpush1.msra.mxu0 0.0
      %413 = vmatprep.subr.mxu0 0.0
      %414 = vmatpush1.msra.mxu0 0.0
      %415 = vmatprep.subr.mxu0 0.0
      %416 = vmatpush1.msra.mxu0 0.0
      %417 = vmatprep.subr.mxu0 0.0
      %418 = vmatpush1.msra.mxu0 0.0
      %419 = vmatprep.subr.mxu0 0.0
      %420 = vmatpush1.msra.mxu0 0.0
      %421 = vmatprep.subr.mxu0 0.0
      %422 = vmatpush1.msra.mxu0 0.0
      %423 = vmatprep.subr.mxu0 0.0
      %424 = vmatpush1.msra.mxu0 0.0
      %425 = vmatprep.subr.mxu0 0.0
      %426 = vmatpush1.msra.mxu0 0.0
      %427 = vmatprep.subr.mxu0 0.0
      %428 = vmatpush1.msra.mxu0 0.0
      %429 = vmatprep.subr.mxu0 0.0
      %430 = vmatpush1.msra.mxu0 0.0
      %431 = vmatprep.subr.mxu0 0.0
      %432 = vmatpush1.msra.mxu0 0.0
      %433 = vmatprep.subr.mxu0 0.0
      %434 = vmatpush1.msra.mxu0 0.0
      %435 = vmatprep.subr.mxu0 0.0
      %436 = vmatpush1.msra.mxu0 0.0
      %437 = vmatprep.subr.mxu0 0.0
      %438 = vmatpush1.msra.mxu0 0.0
      %439 = vmatprep.subr.mxu0 0.0
      %440 = vmatpush1.msra.mxu0 0.0
      %441 = vmatprep.subr.mxu0 0.0
      %442 = vmatpush1.msra.mxu0 0.0
      %443 = vmatprep.subr.mxu0 0.0
      %444 = vmatpush1.msra.mxu0 0.0
      %445 = vmatprep.subr.mxu0 0.0
      %446 = vmatpush1.msra.mxu0 0.0
      %447 = vmatprep.subr.mxu0 0.0
      %448 = vmatpush1.msra.mxu0 0.0
      %449 = vmatprep.subr.mxu0 0.0
      %450 = vmatpush1.msra.mxu0 0.0
      %451 = vmatprep.subr.mxu0 0.0
      %452 = vmatpush1.msra.mxu0 0.0
      %453 = vmatprep.subr.mxu0 0.0
      %454 = vmatpush1.msra.mxu0 0.0
      %455 = vmatprep.subr.mxu0 0.0
      %456 = vmatpush1.msra.mxu0 0.0
      %457 = vmatprep.mubr.f32.mxu0 0.0
      %458 = vmatmul.mubr.f32.gmra.mrb[0].mxu0 %v355
      %v459 = vpop.f32.mrb[0].mxu0
      %v460 = vadd.f32 0.0, %v459
      %v461 = vpop.f32.mrb[0].mxu0
      %462 = vmatprep.mubr.f32.mxu0 0.0
      %463 = vmatmul.mubr.f32.gmra.mrb[0].mxu0 %v358
      %v464 = vpop.f32.mrb[0].mxu0
      %v465 = vadd.f32 0.0, %v464
      %v466 = vpop.f32.mrb[0].mxu0
      %467 = vmatprep.mubr.f32.mxu0 0.0
      %468 = vmatmul.mubr.f32.gmra.mrb[0].mxu0 %v361
      %v469 = vpop.f32.mrb[0].mxu0
      %v470 = vadd.f32 0.0, %v469
      %v471 = vpop.f32.mrb[0].mxu0
      %472 = vmatprep.mubr.f32.mxu0 0.0
      %473 = vmatmul.mubr.f32.gmra.mrb[0].mxu0 %v364
      %v474 = vpop.f32.mrb[0].mxu0
      %v475 = vadd.f32 0.0, %v474
      %v476 = vpop.f32.mrb[0].mxu0
      %477 = vmatprep.mubr.f32.mxu0 0.0
      %478 = vmatmul.mubr.f32.gmra.mrb[0].mxu0 %v367
      %v479 = vpop.f32.mrb[0].mxu0
      %v480 = vadd.f32 0.0, %v479
      %v481 = vpop.f32.mrb[0].mxu0
      %482 = vmatprep.mubr.f32.mxu0 0.0
      %483 = vmatmul.mubr.f32.gmra.mrb[0].mxu0 %v370
      %v484 = vpop.f32.mrb[0].mxu0
      %v485 = vadd.f32 0.0, %v484
      %v486 = vpop.f32.mrb[0].mxu0
      %487 = vmatprep.mubr.f32.mxu0 0.0
      %488 = vmatmul.mubr.f32.gmra.mrb[0].mxu0 %v373
      %v489 = vpop.f32.mrb[0].mxu0
      %v490 = vadd.f32 0.0, %v489
      %v491 = vpop.f32.mrb[0].mxu0
      %492 = vmatprep.mubr.f32.mxu0 0.0
      %493 = vmatmul.mubr.f32.gmra.mrb[0].mxu0 %v376
      %v494 = vpop.f32.mrb[0].mxu0
      %v495 = vadd.f32 0.0, %v494
      %v496 = vpop.f32.mrb[0].mxu0
      %497 = vmatprep.mubr.f32.mxu0 0.0
      %498 = vmatmul.mubr.f32.gmra.mrb[0].mxu0 %v379
      %v499 = vpop.f32.mrb[0].mxu0
      %v500 = vadd.f32 0.0, %v499
      %v501 = vpop.f32.mrb[0].mxu0
      %502 = vmatprep.mubr.f32.mxu0 0.0
      %503 = vmatmul.mubr.f32.gmra.mrb[0].mxu0 %v382
      %v504 = vpop.f32.mrb[0].mxu0
      %v505 = vadd.f32 0.0, %v504
      %v506 = vpop.f32.mrb[0].mxu0
      %507 = vmatprep.mubr.f32.mxu0 0.0
      %508 = vmatmul.mubr.f32.gmra.mrb[0].mxu0 %v385
      %v509 = vpop.f32.mrb[0].mxu0
      %v510 = vadd.f32 0.0, %v509
      %v511 = vpop.f32.mrb[0].mxu0
      %512 = vmatprep.mubr.f32.mxu0 0.0
      %513 = vmatmul.mubr.f32.gmra.mrb[0].mxu0 %v388
      %v514 = vpop.f32.mrb[0].mxu0
      %v515 = vadd.f32 0.0, %v514
      %v516 = vpop.f32.mrb[0].mxu0
      %517 = vmatprep.mubr.f32.mxu0 0.0
      %518 = vmatmul.mubr.f32.gmra.mrb[0].mxu0 %v391
      %v519 = vpop.f32.mrb[0].mxu0
      %v520 = vadd.f32 0.0, %v519
      %v521 = vpop.f32.mrb[0].mxu0
      %522 = vdwg.mxu0
      %v523 = vld [vmem:[%s2] sm:$0x1]
      %v525 = vlaneseq
      %v526 = vshrl.u32 %v525, 7
      %v527 = vsub.s32 0, %v526
      %v528 = vrot.slane %v523, %v527
      %v530 = vmul.f32 %v460, %v528
      %v531 = vmul.f32 %v465, %v528
      %v532 = vmul.f32 %v470, %v528
      %v533 = vmul.f32 %v475, %v528
      %v534 = vmul.f32 %v480, %v528
      %v535 = vmul.f32 %v485, %v528
      %v536 = vmul.f32 %v490, %v528
      %v537 = vmul.f32 %v495, %v528
      %v538 = vmul.f32 %v500, %v528
      %v539 = vmul.f32 %v505, %v528
      %v540 = vmul.f32 %v510, %v528
      %v541 = vmul.f32 %v515, %v528
      %v542 = vmul.f32 %v520, %v528
      %v543 = vld [vmem:[%s3] sm:$0x1]
      %v545 = vlaneseq
      %v546 = vshrl.u32 %v545, 7
      %v547 = vsub.s32 0, %v546
      %v548 = vrot.slane %v543, %v547
      %v550 = vadd.f32 %v530, %v548
      %v551 = vadd.f32 %v531, %v548
      %v552 = vadd.f32 %v532, %v548
      %v553 = vadd.f32 %v533, %v548
      %v554 = vadd.f32 %v534, %v548
      %v555 = vadd.f32 %v535, %v548
      %v556 = vadd.f32 %v536, %v548
      %v557 = vadd.f32 %v537, %v548
      %v558 = vadd.f32 %v538, %v548
      %v559 = vadd.f32 %v539, %v548
      %v560 = vadd.f32 %v540, %v548
      %v561 = vadd.f32 %v541, %v548
      %v562 = vadd.f32 %v542, %v548
      %v563 = vmax.f32 %v550, 0.0
      %v564 = vmax.f32 %v551, 0.0
      %v565 = vmax.f32 %v552, 0.0
      %v566 = vmax.f32 %v553, 0.0
      %v567 = vmax.f32 %v554, 0.0
      %v568 = vmax.f32 %v555, 0.0
      %v569 = vmax.f32 %v556, 0.0
      %v570 = vmax.f32 %v557, 0.0
      %v571 = vmax.f32 %v558, 0.0
      %v572 = vmax.f32 %v559, 0.0
      %v573 = vmax.f32 %v560, 0.0
      %v574 = vmax.f32 %v561, 0.0
      %v575 = vmax.f32 %v562, 0.0
      %v576 = vld [vmem:[%s4] sm:$0xff]
      %v577 = vld [vmem:[%s4 + $0x8] sm:$0xff]
      %v578 = vld [vmem:[%s4 + $0x10] sm:$0xff]
      %v579 = vld [vmem:[%s4 + $0x18] sm:$0xff]
      %v580 = vld [vmem:[%s4 + $0x20] sm:$0xff]
      %v581 = vld [vmem:[%s4 + $0x28] sm:$0xff]
      %v582 = vld [vmem:[%s4 + $0x30] sm:$0xff]
      %v583 = vld [vmem:[%s4 + $0x38] sm:$0xff]
      %vm584 = vcmask 523264
      %v586 = vsel %vm584, %v563, 0
      %v589 = vsel %vm584, %v564, 0
      %v592 = vsel %vm584, %v565, 0
      %v595 = vsel %vm584, %v566, 0
      %v598 = vsel %vm584, %v567, 0
      %v601 = vsel %vm584, %v568, 0
      %v604 = vsel %vm584, %v569, 0
      %v607 = vsel %vm584, %v570, 0
      %v610 = vsel %vm584, %v571, 0
      %v613 = vsel %vm584, %v572, 0
      %v616 = vsel %vm584, %v573, 0
      %v619 = vsel %vm584, %v574, 0
      %v622 = vsel %vm584, %v575, 0
      %624 = vmatprep.subr.mxu0 0.0
      %625 = vmatpush1.msra.mxu0 %v576
      %626 = vmatprep.subr.mxu0 0.0
      %627 = vmatpush1.msra.mxu0 %v577
      %628 = vmatprep.subr.mxu0 0.0
      %629 = vmatpush1.msra.mxu0 %v578
      %630 = vmatprep.subr.mxu0 0.0
      %631 = vmatpush1.msra.mxu0 %v579
      %632 = vmatprep.subr.mxu0 0.0
      %633 = vmatpush1.msra.mxu0 %v580
      %634 = vmatprep.subr.mxu0 0.0
      %635 = vmatpush1.msra.mxu0 %v581
      %636 = vmatprep.subr.mxu0 0.0
      %637 = vmatpush1.msra.mxu0 %v582
      %638 = vmatprep.subr.mxu0 0.0
      %639 = vmatpush1.msra.mxu0 %v583
      %640 = vmatprep.subr.mxu0 0.0
      %641 = vmatpush1.msra.mxu0 0.0
      %642 = vmatprep.subr.mxu0 0.0
      %643 = vmatpush1.msra.mxu0 0.0
      %644 = vmatprep.subr.mxu0 0.0
      %645 = vmatpush1.msra.mxu0 0.0
      %646 = vmatprep.subr.mxu0 0.0
      %647 = vmatpush1.msra.mxu0 0.0
      %648 = vmatprep.subr.mxu0 0.0
      %649 = vmatpush1.msra.mxu0 0.0
      %650 = vmatprep.subr.mxu0 0.0
      %651 = vmatpush1.msra.mxu0 0.0
      %652 = vmatprep.subr.mxu0 0.0
      %653 = vmatpush1.msra.mxu0 0.0
      %654 = vmatprep.subr.mxu0 0.0
      %655 = vmatpush1.msra.mxu0 0.0
      %656 = vmatprep.subr.mxu0 0.0
      %657 = vmatpush1.msra.mxu0 0.0
      %658 = vmatprep.subr.mxu0 0.0
      %659 = vmatpush1.msra.mxu0 0.0
      %660 = vmatprep.subr.mxu0 0.0
      %661 = vmatpush1.msra.mxu0 0.0
      %662 = vmatprep.subr.mxu0 0.0
      %663 = vmatpush1.msra.mxu0 0.0
      %664 = vmatprep.subr.mxu0 0.0
      %665 = vmatpush1.msra.mxu0 0.0
      %666 = vmatprep.subr.mxu0 0.0
      %667 = vmatpush1.msra.mxu0 0.0
      %668 = vmatprep.subr.mxu0 0.0
      %669 = vmatpush1.msra.mxu0 0.0
      %670 = vmatprep.subr.mxu0 0.0
      %671 = vmatpush1.msra.mxu0 0.0
      %672 = vmatprep.subr.mxu0 0.0
      %673 = vmatpush1.msra.mxu0 0.0
      %674 = vmatprep.subr.mxu0 0.0
      %675 = vmatpush1.msra.mxu0 0.0
      %676 = vmatprep.subr.mxu0 0.0
      %677 = vmatpush1.msra.mxu0 0.0
      %678 = vmatprep.subr.mxu0 0.0
      %679 = vmatpush1.msra.mxu0 0.0
      %680 = vmatprep.subr.mxu0 0.0
      %681 = vmatpush1.msra.mxu0 0.0
      %682 = vmatprep.subr.mxu0 0.0
      %683 = vmatpush1.msra.mxu0 0.0
      %684 = vmatprep.subr.mxu0 0.0
      %685 = vmatpush1.msra.mxu0 0.0
      %686 = vmatprep.subr.mxu0 0.0
      %687 = vmatpush1.msra.mxu0 0.0
      %688 = vmatprep.mubr.f32.mxu0 0.0
      %689 = vmatmul.mubr.f32.gmra.mrb[0].mxu0 %v586
      %v690 = vpop.f32.mrb[0].mxu0
      %v691 = vadd.f32 0.0, %v690
      %v692 = vpop.f32.mrb[0].mxu0
      %693 = vmatprep.mubr.f32.mxu0 0.0
      %694 = vmatmul.mubr.f32.gmra.mrb[0].mxu0 %v589
      %v695 = vpop.f32.mrb[0].mxu0
      %v696 = vadd.f32 0.0, %v695
      %v697 = vpop.f32.mrb[0].mxu0
      %698 = vmatprep.mubr.f32.mxu0 0.0
      %699 = vmatmul.mubr.f32.gmra.mrb[0].mxu0 %v592
      %v700 = vpop.f32.mrb[0].mxu0
      %v701 = vadd.f32 0.0, %v700
      %v702 = vpop.f32.mrb[0].mxu0
      %703 = vmatprep.mubr.f32.mxu0 0.0
      %704 = vmatmul.mubr.f32.gmra.mrb[0].mxu0 %v595
      %v705 = vpop.f32.mrb[0].mxu0
      %v706 = vadd.f32 0.0, %v705
      %v707 = vpop.f32.mrb[0].mxu0
      %708 = vmatprep.mubr.f32.mxu0 0.0
      %709 = vmatmul.mubr.f32.gmra.mrb[0].mxu0 %v598
      %v710 = vpop.f32.mrb[0].mxu0
      %v711 = vadd.f32 0.0, %v710
      %v712 = vpop.f32.mrb[0].mxu0
      %713 = vmatprep.mubr.f32.mxu0 0.0
      %714 = vmatmul.mubr.f32.gmra.mrb[0].mxu0 %v601
      %v715 = vpop.f32.mrb[0].mxu0
      %v716 = vadd.f32 0.0, %v715
      %v717 = vpop.f32.mrb[0].mxu0
      %718 = vmatprep.mubr.f32.mxu0 0.0
      %719 = vmatmul.mubr.f32.gmra.mrb[0].mxu0 %v604
      %v720 = vpop.f32.mrb[0].mxu0
      %v721 = vadd.f32 0.0, %v720
      %v722 = vpop.f32.mrb[0].mxu0
      %723 = vmatprep.mubr.f32.mxu0 0.0
      %724 = vmatmul.mubr.f32.gmra.mrb[0].mxu0 %v607
      %v725 = vpop.f32.mrb[0].mxu0
      %v726 = vadd.f32 0.0, %v725
      %v727 = vpop.f32.mrb[0].mxu0
      %728 = vmatprep.mubr.f32.mxu0 0.0
      %729 = vmatmul.mubr.f32.gmra.mrb[0].mxu0 %v610
      %v730 = vpop.f32.mrb[0].mxu0
      %v731 = vadd.f32 0.0, %v730
      %v732 = vpop.f32.mrb[0].mxu0
      %733 = vmatprep.mubr.f32.mxu0 0.0
      %734 = vmatmul.mubr.f32.gmra.mrb[0].mxu0 %v613
      %v735 = vpop.f32.mrb[0].mxu0
      %v736 = vadd.f32 0.0, %v735
      %v737 = vpop.f32.mrb[0].mxu0
      %738 = vmatprep.mubr.f32.mxu0 0.0
      %739 = vmatmul.mubr.f32.gmra.mrb[0].mxu0 %v616
      %v740 = vpop.f32.mrb[0].mxu0
      %v741 = vadd.f32 0.0, %v740
      %v742 = vpop.f32.mrb[0].mxu0
      %743 = vmatprep.mubr.f32.mxu0 0.0
      %744 = vmatmul.mubr.f32.gmra.mrb[0].mxu0 %v619
      %v745 = vpop.f32.mrb[0].mxu0
      %v746 = vadd.f32 0.0, %v745
      %v747 = vpop.f32.mrb[0].mxu0
      %748 = vmatprep.mubr.f32.mxu0 0.0
      %749 = vmatmul.mubr.f32.gmra.mrb[0].mxu0 %v622
      %v750 = vpop.f32.mrb[0].mxu0
      %v751 = vadd.f32 0.0, %v750
      %v752 = vpop.f32.mrb[0].mxu0
      %753 = vdwg.mxu0
      %v754 = vld [vmem:[%s5] sm:$0x1]
      %v756 = vlaneseq
      %v757 = vshrl.u32 %v756, 7
      %v758 = vsub.s32 0, %v757
      %v759 = vrot.slane %v754, %v758
      %v761 = vmul.f32 %v691, %v759
      %v762 = vmul.f32 %v696, %v759
      %v763 = vmul.f32 %v701, %v759
      %v764 = vmul.f32 %v706, %v759
      %v765 = vmul.f32 %v711, %v759
      %v766 = vmul.f32 %v716, %v759
      %v767 = vmul.f32 %v721, %v759
      %v768 = vmul.f32 %v726, %v759
      %v769 = vmul.f32 %v731, %v759
      %v770 = vmul.f32 %v736, %v759
      %v771 = vmul.f32 %v741, %v759
      %v772 = vmul.f32 %v746, %v759
      %v773 = vmul.f32 %v751, %v759
      %v774 = vld [vmem:[%s6] sm:$0x1]
      %v776 = vlaneseq
      %v777 = vshrl.u32 %v776, 7
      %v778 = vsub.s32 0, %v777
      %v779 = vrot.slane %v774, %v778
      %v781 = vadd.f32 %v761, %v779
      %v782 = vadd.f32 %v762, %v779
      %v783 = vadd.f32 %v763, %v779
      %v784 = vadd.f32 %v764, %v779
      %v785 = vadd.f32 %v765, %v779
      %v786 = vadd.f32 %v766, %v779
      %v787 = vadd.f32 %v767, %v779
      %v788 = vadd.f32 %v768, %v779
      %v789 = vadd.f32 %v769, %v779
      %v790 = vadd.f32 %v770, %v779
      %v791 = vadd.f32 %v771, %v779
      %v792 = vadd.f32 %v772, %v779
      %v793 = vadd.f32 %v773, %v779
      %v794 = vmax.f32 %v781, 0.0
      %v795 = vmax.f32 %v782, 0.0
      %v796 = vmax.f32 %v783, 0.0
      %v797 = vmax.f32 %v784, 0.0
      %v798 = vmax.f32 %v785, 0.0
      %v799 = vmax.f32 %v786, 0.0
      %v800 = vmax.f32 %v787, 0.0
      %v801 = vmax.f32 %v788, 0.0
      %v802 = vmax.f32 %v789, 0.0
      %v803 = vmax.f32 %v790, 0.0
      %v804 = vmax.f32 %v791, 0.0
      %v805 = vmax.f32 %v792, 0.0
      %v806 = vmax.f32 %v793, 0.0
      %v807 = vld [vmem:[%s7] sm:$0xff]
      %v808 = vld [vmem:[%s7 + $0x8] sm:$0xff]
      %v809 = vld [vmem:[%s7 + $0x10] sm:$0xff]
      %v810 = vld [vmem:[%s7 + $0x18] sm:$0xff]
      %v811 = vld [vmem:[%s7 + $0x20] sm:$0xff]
      %v812 = vld [vmem:[%s7 + $0x28] sm:$0xff]
      %v813 = vld [vmem:[%s7 + $0x30] sm:$0xff]
      %v814 = vld [vmem:[%s7 + $0x38] sm:$0xff]
      %v815 = vld [vmem:[%s8] sm:$0x1]
      %v817 = vlaneseq
      %v818 = vshrl.u32 %v817, 7
      %v819 = vsub.s32 0, %v818
      %v820 = vrot.slane %v815, %v819
      %v823 = vsel %vm584, %v794, 0
      %v826 = vsel %vm584, %v795, 0
      %v829 = vsel %vm584, %v796, 0
      %v832 = vsel %vm584, %v797, 0
      %v835 = vsel %vm584, %v798, 0
      %v838 = vsel %vm584, %v799, 0
      %v841 = vsel %vm584, %v800, 0
      %v844 = vsel %vm584, %v801, 0
      %v847 = vsel %vm584, %v802, 0
      %v850 = vsel %vm584, %v803, 0
      %v853 = vsel %vm584, %v804, 0
      %v856 = vsel %vm584, %v805, 0
      %v859 = vsel %vm584, %v806, 0
      %861 = vmatprep.subr.mxu0 0.0
      %862 = vmatpush1.msra.mxu0 %v807
      %863 = vmatprep.subr.mxu0 0.0
      %864 = vmatpush1.msra.mxu0 %v808
      %865 = vmatprep.subr.mxu0 0.0
      %866 = vmatpush1.msra.mxu0 %v809
      %867 = vmatprep.subr.mxu0 0.0
      %868 = vmatpush1.msra.mxu0 %v810
      %869 = vmatprep.subr.mxu0 0.0
      %870 = vmatpush1.msra.mxu0 %v811
      %871 = vmatprep.subr.mxu0 0.0
      %872 = vmatpush1.msra.mxu0 %v812
      %873 = vmatprep.subr.mxu0 0.0
      %874 = vmatpush1.msra.mxu0 %v813
      %875 = vmatprep.subr.mxu0 0.0
      %876 = vmatpush1.msra.mxu0 %v814
      %877 = vmatprep.subr.mxu0 0.0
      %878 = vmatpush1.msra.mxu0 0.0
      %879 = vmatprep.subr.mxu0 0.0
      %880 = vmatpush1.msra.mxu0 0.0
      %881 = vmatprep.subr.mxu0 0.0
      %882 = vmatpush1.msra.mxu0 0.0
      %883 = vmatprep.subr.mxu0 0.0
      %884 = vmatpush1.msra.mxu0 0.0
      %885 = vmatprep.subr.mxu0 0.0
      %886 = vmatpush1.msra.mxu0 0.0
      %887 = vmatprep.subr.mxu0 0.0
      %888 = vmatpush1.msra.mxu0 0.0
      %889 = vmatprep.subr.mxu0 0.0
      %890 = vmatpush1.msra.mxu0 0.0
      %891 = vmatprep.subr.mxu0 0.0
      %892 = vmatpush1.msra.mxu0 0.0
      %893 = vmatprep.subr.mxu0 0.0
      %894 = vmatpush1.msra.mxu0 0.0
      %895 = vmatprep.subr.mxu0 0.0
      %896 = vmatpush1.msra.mxu0 0.0
      %897 = vmatprep.subr.mxu0 0.0
      %898 = vmatpush1.msra.mxu0 0.0
      %899 = vmatprep.subr.mxu0 0.0
      %900 = vmatpush1.msra.mxu0 0.0
      %901 = vmatprep.subr.mxu0 0.0
      %902 = vmatpush1.msra.mxu0 0.0
      %903 = vmatprep.subr.mxu0 0.0
      %904 = vmatpush1.msra.mxu0 0.0
      %905 = vmatprep.subr.mxu0 0.0
      %906 = vmatpush1.msra.mxu0 0.0
      %907 = vmatprep.subr.mxu0 0.0
      %908 = vmatpush1.msra.mxu0 0.0
      %909 = vmatprep.subr.mxu0 0.0
      %910 = vmatpush1.msra.mxu0 0.0
      %911 = vmatprep.subr.mxu0 0.0
      %912 = vmatpush1.msra.mxu0 0.0
      %913 = vmatprep.subr.mxu0 0.0
      %914 = vmatpush1.msra.mxu0 0.0
      %915 = vmatprep.subr.mxu0 0.0
      %916 = vmatpush1.msra.mxu0 0.0
      %917 = vmatprep.subr.mxu0 0.0
      %918 = vmatpush1.msra.mxu0 0.0
      %919 = vmatprep.subr.mxu0 0.0
      %920 = vmatpush1.msra.mxu0 0.0
      %921 = vmatprep.subr.mxu0 0.0
      %922 = vmatpush1.msra.mxu0 0.0
      %923 = vmatprep.subr.mxu0 0.0
      %924 = vmatpush1.msra.mxu0 0.0
      %925 = vmatprep.mubr.f32.mxu0 0.0
      %926 = vmatmul.mubr.f32.gmra.mrb[0].mxu0 %v823
      %v927 = vpop.f32.mrb[0].mxu0
      %v928 = vadd.f32 %v820, %v927
      %v929 = vpop.f32.mrb[0].mxu0
      %930 = vmatprep.mubr.f32.mxu0 0.0
      %931 = vmatmul.mubr.f32.gmra.mrb[0].mxu0 %v826
      %v932 = vpop.f32.mrb[0].mxu0
      %v933 = vadd.f32 %v820, %v932
      %v934 = vpop.f32.mrb[0].mxu0
      %935 = vmatprep.mubr.f32.mxu0 0.0
      %936 = vmatmul.mubr.f32.gmra.mrb[0].mxu0 %v829
      %v937 = vpop.f32.mrb[0].mxu0
      %v938 = vadd.f32 %v820, %v937
      %v939 = vpop.f32.mrb[0].mxu0
      %940 = vmatprep.mubr.f32.mxu0 0.0
      %941 = vmatmul.mubr.f32.gmra.mrb[0].mxu0 %v832
      %v942 = vpop.f32.mrb[0].mxu0
      %v943 = vadd.f32 %v820, %v942
      %v944 = vpop.f32.mrb[0].mxu0
      %945 = vmatprep.mubr.f32.mxu0 0.0
      %946 = vmatmul.mubr.f32.gmra.mrb[0].mxu0 %v835
      %v947 = vpop.f32.mrb[0].mxu0
      %v948 = vadd.f32 %v820, %v947
      %v949 = vpop.f32.mrb[0].mxu0
      %950 = vmatprep.mubr.f32.mxu0 0.0
      %951 = vmatmul.mubr.f32.gmra.mrb[0].mxu0 %v838
      %v952 = vpop.f32.mrb[0].mxu0
      %v953 = vadd.f32 %v820, %v952
      %v954 = vpop.f32.mrb[0].mxu0
      %955 = vmatprep.mubr.f32.mxu0 0.0
      %956 = vmatmul.mubr.f32.gmra.mrb[0].mxu0 %v841
      %v957 = vpop.f32.mrb[0].mxu0
      %v958 = vadd.f32 %v820, %v957
      %v959 = vpop.f32.mrb[0].mxu0
      %960 = vmatprep.mubr.f32.mxu0 0.0
      %961 = vmatmul.mubr.f32.gmra.mrb[0].mxu0 %v844
      %v962 = vpop.f32.mrb[0].mxu0
      %v963 = vadd.f32 %v820, %v962
      %v964 = vpop.f32.mrb[0].mxu0
      %965 = vmatprep.mubr.f32.mxu0 0.0
      %966 = vmatmul.mubr.f32.gmra.mrb[0].mxu0 %v847
      %v967 = vpop.f32.mrb[0].mxu0
      %v968 = vadd.f32 %v820, %v967
      %v969 = vpop.f32.mrb[0].mxu0
      %970 = vmatprep.mubr.f32.mxu0 0.0
      %971 = vmatmul.mubr.f32.gmra.mrb[0].mxu0 %v850
      %v972 = vpop.f32.mrb[0].mxu0
      %v973 = vadd.f32 %v820, %v972
      %v974 = vpop.f32.mrb[0].mxu0
      %975 = vmatprep.mubr.f32.mxu0 0.0
      %976 = vmatmul.mubr.f32.gmra.mrb[0].mxu0 %v853
      %v977 = vpop.f32.mrb[0].mxu0
      %v978 = vadd.f32 %v820, %v977
      %v979 = vpop.f32.mrb[0].mxu0
      %980 = vmatprep.mubr.f32.mxu0 0.0
      %981 = vmatmul.mubr.f32.gmra.mrb[0].mxu0 %v856
      %v982 = vpop.f32.mrb[0].mxu0
      %v983 = vadd.f32 %v820, %v982
      %v984 = vpop.f32.mrb[0].mxu0
      %985 = vmatprep.mubr.f32.mxu0 0.0
      %986 = vmatmul.mubr.f32.gmra.mrb[0].mxu0 %v859
      %v987 = vpop.f32.mrb[0].mxu0
      %v988 = vadd.f32 %v820, %v987
      %v989 = vpop.f32.mrb[0].mxu0
      %990 = vdwg.mxu0
      %vm991 = vcmask 130048
      %992 = vst.msk [vmem:[%s334] sm:$0xff] %vm991, %v928
      %993 = vst.msk [vmem:[%s334 + $0x8] sm:$0xff] %vm991, %v933
      %994 = vst.msk [vmem:[%s334 + $0x10] sm:$0xff] %vm991, %v938
      %995 = vst.msk [vmem:[%s334 + $0x18] sm:$0xff] %vm991, %v943
      %996 = vst.msk [vmem:[%s334 + $0x20] sm:$0xff] %vm991, %v948
      %997 = vst.msk [vmem:[%s334 + $0x28] sm:$0xff] %vm991, %v953
      %998 = vst.msk [vmem:[%s334 + $0x30] sm:$0xff] %vm991, %v958
      %999 = vst.msk [vmem:[%s334 + $0x38] sm:$0xff] %vm991, %v963
      %1000 = vst.msk [vmem:[%s334 + $0x40] sm:$0xff] %vm991, %v968
      %1001 = vst.msk [vmem:[%s334 + $0x48] sm:$0xff] %vm991, %v973
      %1002 = vst.msk [vmem:[%s334 + $0x50] sm:$0xff] %vm991, %v978
      %1003 = vst.msk [vmem:[%s334 + $0x58] sm:$0xff] %vm991, %v983
      %1004 = vst.msk [vmem:[%s334 + $0x60] sm:$0xff] %vm991, %v988
      %s1005 = smul.u32 13, %s20
      %p1006 = scmp.lt.s32.totalorder %s1005, 25
      %s1007 = scalar_select %p1006, %s1005, 25
      %s1008 = smul.addr %s1007, 8
      %s1009 = scalar_lea.vmem %s9, %s1008
      // Predicated region
      $region57: #{tpu_custom_call.1} parent=55 // pred_check
        %p1010 = pneg %p232
      $region58: #{tpu_custom_call.1} parent=55 // pred_check_branch
        %1012 = sbr.rel (%p1010) target = $region60
      $region59: #{tpu_custom_call.1} parent=55 // pred_region
        %s1013 = smul.u32 13, %s20
      $region60: #{tpu_custom_call.1} parent=55 // pred_fallthru
        _
    $region56: #{tpu_custom_call.1} parent=5 // pred_fallthru
      _
    %p1014 = scmp.le.s32.totalorder 2, %s15
    // Predicated region
    $region61: #{tpu_custom_call.1} parent=5 // pred_check
      %p1015 = pneg %p1014
    $region62: #{tpu_custom_call.1} parent=5 // pred_check_branch
      %1017 = sbr.rel (%p1015) target = $region64
    $region63: #{tpu_custom_call.1} parent=5 // pred_region
      %s1018 = ssub.s32 %s15, 2
      // Predicated region
      $region65: #{tpu_custom_call.1} parent=63 // pred_check
        %p1019 = pneg %p238
      $region66: #{tpu_custom_call.1} parent=63 // pred_check_branch
        %1021 = sbr.rel (%p1019) target = $region68
      $region67: #{tpu_custom_call.1} parent=63 // pred_region
        %s1022 = smul.u32 13, %s21
        %p1023 = scmp.lt.s32.totalorder %s1022, 25
        %s1024 = scalar_select %p1023, %s1022, 25
        %s1025 = smul.addr %s1024, 8
        %s1026 = scalar_lea.vmem %s9, %s1025
      $region68: #{tpu_custom_call.1} parent=63 // pred_fallthru
        _
    $region64: #{tpu_custom_call.1} parent=5 // pred_fallthru
      _
  $region6: #{tpu_custom_call.1} parent=0 // loop_footer
    %s19 = sadd.s32 1, %s15
  $region7: #{tpu_custom_call.1} parent=0 // loop_footer_branch
    %14 = sbr.rel target = $region3
  $region8: #{tpu_custom_call.1} parent=0 // loop_exit
    _

</llo_original>
